<compile_context>
chip_gen: v6e
topology: v6e:2x2x1
jax: 0.10.0
libtpu: 0.0.40
codegen_flags: <defaults>
</compile_context>

<pallas_src>
import math

import numpy as np
import jax
import jax.numpy as jnp
from jax.experimental import pallas as pl
from jax.experimental.pallas import tpu as pltpu


# ---------------------------------------------------------------------------
# Small helpers
# ---------------------------------------------------------------------------
def _round_up(x, m):
    return -(-x // m) * m


def _vmem_limit_bytes():
    """Scoped-VMEM budget from the actual chip (v5e/v6e ~96 MiB, v7x 48 MiB)."""
    try:
        cap = int(pltpu.get_tpu_info().vmem_capacity_bytes)
    except Exception:
        cap = 64 * 1024 * 1024
    return int(min(cap * 3 // 4, cap - 4 * 1024 * 1024))


def _windows_all_equal(window):
    """True iff every channel's window is identical (concrete arrays only;
    tracers conservatively return False -> per-channel path)."""
    try:
        w = np.asarray(jax.device_get(window))
    except Exception:
        return False
    w = w.reshape(w.shape[0], -1)
    return bool(np.all(w == w[:1]))


# ---------------------------------------------------------------------------
# Band geometry
# ---------------------------------------------------------------------------
def _band_geometry(window_size, hop_length, padding, l_tile):
    """Frame band covering one output tile of l_tile samples.

    For tile j (start n0 = j*l_tile, l_tile a multiple of hop) every
    contributing frame lies in [j*S + t_off, j*S + t_off + t_band),
    S = l_tile // hop, with (t_off, t_band) independent of j.
    """
    t_off = -((window_size - 1 - padding) // hop_length)          # <= 0
    t_hi = (l_tile - 1 + padding) // hop_length
    return t_off, t_hi - t_off + 1


def _choose_l_tile(total_len, hop_length, window_size, target=None):
    """Lane-dense tile width: multiple of lcm(hop,128) (tile-invariant band,
    unmasked stores), capped near ~4 windows so the band matrix stays small."""
    unit = hop_length * 128 // math.gcd(hop_length, 128)
    if target is None:
        target = min(4096, max(256, 4 * window_size))
    l_tile = max(unit, (int(target) // unit) * unit)
    return min(l_tile, _round_up(total_len, unit))


def _choose_rows_block(rows, l_tile, out_bytes, target=None):
    """(rows_block, rows_padded): multiple-of-8 row blocks, ~2 MiB out block."""
    if target is None:
        target = (2 * 1024 * 1024) // max(1, l_tile * out_bytes)
    target = max(8, min(1024, (int(target) // 8) * 8))
    rows8 = _round_up(rows, 8)
    if rows8 <= target:
        return rows8, rows8
    return target, _round_up(rows, target)


def _choose_tiles_block(num_tiles, l_tile, target=None):
    """(n_j, num_tiles_padded) for the per-channel path: n_j output tiles are
    stacked on the MXU row axis per grid step (rows = n_j >= 8)."""
    if target is None:
        target = max(8, min(128, 32768 // max(1, l_tile)))
    target = max(1, int(target))
    if num_tiles <= target:
        n_tp = _round_up(num_tiles, 8) if num_tiles < 8 else num_tiles
        return n_tp, n_tp
    n_j = max(8, (target // 8) * 8)
    return n_j, _round_up(num_tiles, n_j)


def _band_matrix(w, t_off, t_band, l_tile, padding, hop_length, dtype):
    """M[..., s, m] = w[..., m + padding - (t_off+s)*hop], 0 outside [0, W)."""
    window_size = w.shape[-1]
    s = jnp.arange(t_band)
    m = jnp.arange(l_tile)
    tap = m[None, :] + padding - (t_off + s[:, None]) * hop_length
    valid = (tap >= 0) & (tap < window_size)
    gathered = jnp.take(w, jnp.clip(tap, 0, window_size - 1).reshape(-1), axis=-1)
    gathered = gathered.reshape(w.shape[:-1] + (t_band, l_tile))
    return jnp.where(valid, gathered, 0.0).astype(dtype)


def _gather_frame_bands(x_padded, num_tiles, stride, t_band):
    """x[..., T_pad] -> (..., num_tiles, t_band); band j starts at j*stride."""
    # TODO(synk): fuse this overlapping-window gather into the kernel
    # (memory_space=pl.ANY + manual pltpu.make_async_copy with pl.ds) to drop
    # one extra HBM pass over x; x is ~hop x smaller than y so it is a small win.
    idx = (jnp.arange(num_tiles)[:, None] * stride +
           jnp.arange(t_band)[None, :]).reshape(-1)
    xb = jnp.take(x_padded, idx, axis=-1)
    return xb.reshape(x_padded.shape[:-1] + (num_tiles, t_band))


# ---------------------------------------------------------------------------
# Kernel (shared by both paths)
# ---------------------------------------------------------------------------
def _band_matmul_kernel(x_ref, m_ref, o_ref):
    # x_ref: (rows_blk, t_band)  m_ref: (t_band, l_tile)  o_ref: (rows_blk, l_tile)
    o_ref[...] = jnp.dot(x_ref[...], m_ref[...],
                         preferred_element_type=jnp.float32).astype(o_ref.dtype)


# ---------------------------------------------------------------------------
# Wrapper
# ---------------------------------------------------------------------------
def learnable_upsampler_forward(x, window, hop_length, *,
                                per_channel_window=None,
                                compute_dtype=jnp.float32,
                                out_dtype=jnp.float32,
                                l_tile_target=None,
                                rows_block_target=None,
                                tiles_block_target=None):
    """Pallas TPU forward of LearnableUpsampler.

    x:      (B, C, T) frames.
    window: (C, 1, W) nn.Parameter (window_fn(W)/W per channel).
    Returns (B, C, L) out_dtype, L = (T-1)*hop + W - 2*((W-hop)//2).

    per_channel_window=None auto-detects: if every channel's window is equal
    (the module's construction), B*C rows share one band matrix; otherwise the
    faithful depthwise path is used. compute_dtype/out_dtype default float32
    (matching PyTorch); bf16 is available with f32 accumulation.
    """
    B, C, T = x.shape
    W = window.shape[-1]
    hop = int(hop_length)
    padding = (W - hop) // 2
    L = (T - 1) * hop + W - 2 * padding

    if per_channel_window is None:
        per_channel_window = not _windows_all_equal(window)

    l_tile = _choose_l_tile(L, hop, W, l_tile_target)
    num_tiles = -(-L // l_tile)
    stride = l_tile // hop                        # frames per tile step
    t_off, t_band = _band_geometry(W, hop, padding, l_tile)
    pad_front = -t_off
    out_bytes = np.dtype(out_dtype).itemsize
    vmem_limit = _vmem_limit_bytes()

    if not per_channel_window:
        # ----- shared-window fast path: B*C rows per matmul -------------------
        rows = B * C
        rows_blk, rows_padded = _choose_rows_block(rows, l_tile, out_bytes,
                                                   rows_block_target)
        l_padded = num_tiles * l_tile
        pad_back = max(0, (num_tiles - 1) * stride + t_band - (T + pad_front))

        w1 = window.reshape(C, W)[0].astype(jnp.float32)
        band_m = _band_matrix(w1, t_off, t_band, l_tile, padding, hop, compute_dtype)

        x_rows = x.astype(compute_dtype).reshape(rows, T)
        x_rows = jnp.pad(x_rows, ((0, rows_padded - rows), (pad_front, pad_back)))
        x_bands = _gather_frame_bands(x_rows, num_tiles, stride, t_band)
        x_bands = jnp.transpose(x_bands, (1, 0, 2))   # (num_tiles, rows_padded, t_band)

        flops = 2 * rows_padded * l_padded * t_band
        bytes_accessed = (x_bands.size * x_bands.dtype.itemsize
                          + band_m.size * band_m.dtype.itemsize
                          + rows_padded * l_padded * out_bytes)

        out = pl.pallas_call(
            _band_matmul_kernel,
            out_shape=jax.ShapeDtypeStruct((rows_padded, l_padded), out_dtype),
            grid=(rows_padded // rows_blk, num_tiles),
            in_specs=[
                pl.BlockSpec((None, rows_blk, t_band), lambda r, j: (j, r, 0)),
                # constant block index -> band matrix fetched once, stays in VMEM
                pl.BlockSpec((t_band, l_tile), lambda r, j: (0, 0)),
            ],
            out_specs=pl.BlockSpec((rows_blk, l_tile), lambda r, j: (r, j)),
            compiler_params=pltpu.CompilerParams(
                dimension_semantics=("parallel", "parallel"),
                vmem_limit_bytes=vmem_limit,
            ),
            cost_estimate=pl.CostEstimate(flops=flops, transcendentals=0,
                                          bytes_accessed=bytes_accessed),
        )(x_bands, band_m)

        return out[:rows, :L].reshape(B, C, L)       # free reshape, no transpose

    # ----- per-channel (depthwise) path: tiles stacked on the MXU row axis ----
    n_j, num_tiles_p = _choose_tiles_block(num_tiles, l_tile, tiles_block_target)
    num_jg = num_tiles_p // n_j
    l_padded = num_tiles_p * l_tile
    pad_back = max(0, (num_tiles_p - 1) * stride + t_band - (T + pad_front))

    w_c = window.reshape(C, W).astype(jnp.float32)
    band_m = _band_matrix(w_c, t_off, t_band, l_tile, padding, hop, compute_dtype)
    # band_m: (C, t_band, l_tile); one channel's slice fetched per channel.

    x_p = jnp.pad(x.astype(compute_dtype),
                  ((0, 0), (0, 0), (pad_front, pad_back)))
    x_bands = _gather_frame_bands(x_p, num_tiles_p, stride, t_band)  # (B,C,ntp,t_band)
    x_bands = jnp.transpose(x_bands, (1, 0, 2, 3))                   # (C,B,ntp,t_band)

    flops = 2 * B * C * l_padded * t_band
    bytes_accessed = (x_bands.size * x_bands.dtype.itemsize
                      + band_m.size * band_m.dtype.itemsize
                      + B * C * l_padded * out_bytes)

    out = pl.pallas_call(
        _band_matmul_kernel,
        out_shape=jax.ShapeDtypeStruct((B, C, num_tiles_p, l_tile), out_dtype),
        # channel outermost so the per-channel band matrix is refetched only on
        # channel change; tile-groups innermost for write locality.
        grid=(C, B, num_jg),
        in_specs=[
            pl.BlockSpec((None, None, n_j, t_band), lambda c, b, g: (c, b, g, 0)),
            pl.BlockSpec((None, t_band, l_tile), lambda c, b, g: (c, 0, 0)),
        ],
        out_specs=pl.BlockSpec((None, None, n_j, l_tile), lambda c, b, g: (b, c, g, 0)),
        compiler_params=pltpu.CompilerParams(
            dimension_semantics=("parallel", "parallel", "parallel"),
            vmem_limit_bytes=vmem_limit,
        ),
        cost_estimate=pl.CostEstimate(flops=flops, transcendentals=0,
                                      bytes_accessed=bytes_accessed),
    )(x_bands, band_m)

    out = out.reshape(B, C, l_padded)
    return out[:, :, :L]


# ---------------------------------------------------------------------------
# Window init + reference
# ---------------------------------------------------------------------------
def make_hann_window(window_size, channels):
    # torch.hann_window(W) (periodic): 0.5 - 0.5*cos(2*pi*n/W), n = 0..W-1
    n = jnp.arange(window_size, dtype=jnp.float32)
    w = 0.5 - 0.5 * jnp.cos(2.0 * jnp.pi * n / window_size)
    w = w / window_size
    return jnp.broadcast_to(w[None, None, :], (channels, 1, window_size))


def reference_conv_transpose1d(x, w, hop_length, padding):
    """Naive numpy reference of grouped conv_transpose1d (groups == channels)."""
    x = np.asarray(x, dtype=np.float64)
    w = np.asarray(w, dtype=np.float64)
    B, C, T = x.shape
    W = w.shape[-1]
    Lf = (T - 1) * hop_length + W
    y_full = np.zeros((B, C, Lf), dtype=np.float64)
    for b in range(B):
        for c in range(C):
            for t in range(T):
                y_full[b, c, t * hop_length:t * hop_length + W] += x[b, c, t] * w[c, 0]
    return y_full[:, :, padding:Lf - padding]


if __name__ == "__main__":
    window_size, hop_length = 16, 4
    padding = (window_size - hop_length) // 2
    B = 2

    key = jax.random.PRNGKey(0)
    k_x, k_w = jax.random.split(key)

    hann4 = make_hann_window(window_size, 4)
    hann40 = make_hann_window(window_size, 40)
    rand_win = jax.random.normal(k_w, (4, 1, window_size), jnp.float32) / window_size

    cases = [
        # name, window, C, T, kwargs, rtol, atol
        ("shared/auto/f32", hann4, 4, 8, {}, 1e-5, 1e-5),
        ("shared/multi-tile/f32", hann4, 4, 80,
         dict(per_channel_window=False, l_tile_target=128), 1e-5, 1e-5),
        ("shared/bf16", hann4, 4, 80,
         dict(per_channel_window=False, compute_dtype=jnp.bfloat16,
              out_dtype=jnp.bfloat16), 5e-2, 5e-3),
        ("shared/row-blocked/f32", hann40, 40, 80,
         dict(l_tile_target=128, rows_block_target=16), 1e-5, 1e-5),
        ("per-channel/auto/f32", rand_win, 4, 8, {}, 1e-5, 1e-5),
        ("per-channel/grouped/f32", rand_win, 4, 300,
         dict(per_channel_window=True, l_tile_target=128, tiles_block_target=8),
         1e-5, 1e-5),
    ]

    for name, win, C, T, kwargs, rtol, atol in cases:
        x = jax.random.normal(jax.random.fold_in(k_x, T * 1000 + C),
                              (B, C, T), dtype=jnp.float32)
        y = learnable_upsampler_forward(x, win, hop_length, **kwargs)
        y = jax.block_until_ready(y)

        y_ref = reference_conv_transpose1d(x, win, hop_length, padding)
        assert y.shape == y_ref.shape, (name, y.shape, y_ref.shape)
        np.testing.assert_allclose(np.asarray(y, dtype=np.float64), y_ref,
                                   rtol=rtol, atol=atol, err_msg=name)

    print("KERNEL_OK")
</pallas_src>

<mosaic_0001>
module attributes {stable_mosaic.version = 11 : i64} {
  func.func @_band_matmul_kernel(%arg0: i32, %arg1: i32, %arg2: memref<1x8x36xf32, #tpu.memory_space<vmem>>, %arg3: memref<36x128xf32, #tpu.memory_space<vmem>>, %arg4: memref<8x128xf32, #tpu.memory_space<vmem>>) attributes {dimension_semantics = [#tpu.dimension_semantics<parallel>, #tpu.dimension_semantics<parallel>], iteration_bounds = array<i64: 1, 1>, scalar_prefetch = 0 : i64, scratch_operands = 0 : i64, tpu.core_type = #tpu.core_type<tc>, window_params = [{transform_indices = @transform_0, window_bounds = array<i64: 1, 8, 36>}, {pipeline_mode = #tpu.pipeline_mode<synchronous>, transform_indices = @transform_1, window_bounds = array<i64: 36, 128>}, {transform_indices = @transform_2, window_bounds = array<i64: 8, 128>}]} {
    %c0 = arith.constant 0 : index
    %c0_0 = arith.constant 0 : index
    %c0_1 = arith.constant 0 : index
    %0 = vector.load %arg2[%c0, %c0_0, %c0_1] : memref<1x8x36xf32, #tpu.memory_space<vmem>>, vector<1x8x36xf32>
    %1 = vector.shape_cast %0 : vector<1x8x36xf32> to vector<8x36xf32>
    %c0_2 = arith.constant 0 : index
    %c0_3 = arith.constant 0 : index
    %2 = vector.load %arg3[%c0_2, %c0_3] : memref<36x128xf32, #tpu.memory_space<vmem>>, vector<36x128xf32>
    %cst = arith.constant dense<0.000000e+00> : vector<8x128xf32>
    %3 = tpu.matmul %1, %2, %cst {dimension_numbers = #tpu.dot_dimension_numbers<[1], [0], [0], [1], [0, 0, 1, 1], [], []>} : vector<8x36xf32>, vector<36x128xf32>, vector<8x128xf32> -> vector<8x128xf32>
    %c0_4 = arith.constant 0 : index
    %c0_5 = arith.constant 0 : index
    %4 = vector.load %arg4[%c0_4, %c0_5] : memref<8x128xf32, #tpu.memory_space<vmem>>, vector<8x128xf32>
    tpu.vector_store %arg4[%c0_4, %c0_5], %3 {strides = array<i32>} : memref<8x128xf32, #tpu.memory_space<vmem>>, vector<8x128xf32>,
    return
  }
  func.func @transform_0(%arg0: i32, %arg1: i32) -> (i32, i32, i32) {
    %c0_i32 = arith.constant 0 : i32
    %c0_i32_0 = arith.constant 0 : i32
    return %arg1, %arg0, %c0_i32 : i32, i32, i32
  }
  func.func @transform_1(%arg0: i32, %arg1: i32) -> (i32, i32) {
    %c0_i32 = arith.constant 0 : i32
    %c0_i32_0 = arith.constant 0 : i32
    %c0_i32_1 = arith.constant 0 : i32
    return %c0_i32, %c0_i32_0 : i32, i32
  }
  func.func @transform_2(%arg0: i32, %arg1: i32) -> (i32, i32) {
    %c0_i32 = arith.constant 0 : i32
    return %arg0, %arg1 : i32, i32
  }
}

</mosaic_0001>

<llo_original>
// kernel: tpu_custom_call.1
$region0: #{tpu_custom_call.1}
  #allocation0 [shape = 'u32[]', space=smem, size = 0x4, offset = 0x4, fixed_abs, tag = 'smem constant byte address 0x4 - core index']
  #allocation1 [shape = 'u32[144,128]{1,0:T(1,128)}', space=vmem, size = 0x12000, scoped, tag = 'internal scratch']
  %s0 = inlined_call_operand.hbm [shape: f32[1,8,36], index: 0, kind: input, shape index: {}]
  %s1 = inlined_call_operand.hbm [shape: f32[36,128], index: 1, kind: input, shape index: {}]
  %s2 = inlined_call_operand.hbm [shape: f32[8,128], index: 2, kind: output, shape index: {}]
  %s3 = sld [smem:[#allocation0]]
  $region26: #{tpu_custom_call.1} parent=0
    _
  %s5 = ssub.s32 1, %s3
  %s6 = scalar_select 0, %s5, %s3
  $region1: #{tpu_custom_call.1} parent=0
    #allocation2 [shape = 'u8[4096]{0}', space=vmem, size = 0x1000, scoped, tag = 'input window, operand 0, single buffered']
    #allocation3 [shape = 's32[1]{0}', space=sflag, size = 0x4, scoped, tag = 'scoped memory for tpu_custom_call.1']
    #allocation4 [shape = 's32[1]{0}', space=sflag, size = 0x4, scoped, tag = 'scoped memory for tpu_custom_call.1']
    #allocation5 [shape = 'u8[20480]{0}', space=vmem, size = 0x5000, scoped, tag = 'input window, operand 1, single buffered']
    #allocation6 [shape = 's32[1]{0}', space=sflag, size = 0x4, scoped, tag = 'scoped memory for tpu_custom_call.1']
    #allocation7 [shape = 'u8[4096]{0}', space=vmem, size = 0x1000, scoped, tag = 'output window, operand 0, single buffered']
    %7 = vsyncpa [#allocation3], 0
    %8 = vsyncpa [#allocation6], 0
    %9 = vsyncpa [#allocation4], 0
    // Predicated region
    $region2: #{tpu_custom_call.1} parent=1 // pred_check
      _
    $region3: #{tpu_custom_call.1} parent=1 // pred_check_branch
      %11 = sbr.rel (0) target = $region5
    $region4: #{tpu_custom_call.1} parent=1 // pred_region
      %s13 = ssub.s32 128, 128
      %14 = vsyncadd [#allocation3], %s13
      %s16 = sshll.u32 [#allocation2], 4
      %s17 = int_to_ptr.vmem [resolvable:$true] %s16
      %19 = dma.hbm_to_vmem [thread:$0]  %s0, 128, %s17, [#allocation3]
    $region5: #{tpu_custom_call.1} parent=1 // pred_fallthru
      _
    // Predicated region
    $region6: #{tpu_custom_call.1} parent=1 // pred_check
      _
    $region7: #{tpu_custom_call.1} parent=1 // pred_check_branch
      %21 = sbr.rel (0) target = $region9
    $region8: #{tpu_custom_call.1} parent=1 // pred_region
      %s23 = ssub.s32 640, 640
      %24 = vsyncadd [#allocation6], %s23
      %s25 = sshll.u32 [#allocation5], 4
      %s26 = int_to_ptr.vmem [resolvable:$true] %s25
      %31 = dma.hbm_to_vmem [thread:$0]  %s1, 640, %s26, [#allocation6], 128, 128, 8
    $region9: #{tpu_custom_call.1} parent=1 // pred_fallthru
      _
    // Predicated region
    $region10: #{tpu_custom_call.1} parent=1 // pred_check
      _
    $region11: #{tpu_custom_call.1} parent=1 // pred_check_branch
      %33 = sbr.rel (0) target = $region13
    $region12: #{tpu_custom_call.1} parent=1 // pred_region
      %34 = dma.done [#allocation3], 128
    $region13: #{tpu_custom_call.1} parent=1 // pred_fallthru
      _
    // Predicated region
    $region14: #{tpu_custom_call.1} parent=1 // pred_check
      _
    $region15: #{tpu_custom_call.1} parent=1 // pred_check_branch
      %36 = sbr.rel (0) target = $region17
    $region16: #{tpu_custom_call.1} parent=1 // pred_region
      %37 = dma.done [#allocation6], 640
    $region17: #{tpu_custom_call.1} parent=1 // pred_fallthru
      _
    %v38 = vld [vmem:[#allocation2] sm:$0xff]
    %v39 = vld [vmem:[#allocation5] sm:$0xff]
    %v40 = vld [vmem:[#allocation5 + $0x8] sm:$0xff]
    %v41 = vld [vmem:[#allocation5 + $0x10] sm:$0xff]
    %v42 = vld [vmem:[#allocation5 + $0x18] sm:$0xff]
    %v43 = vld [vmem:[#allocation5 + $0x20] sm:$0xf]
    %vm44 = vcmask 293888
    %v46 = vsel %vm44, %v38, 0
    %vm48 = vcmask 1043456
    %v50 = vsel %vm48, %v43, 0
    %52 = vmatprep.subr.mxu0 0.0
    %53 = vmatpush1.msra.mxu0 0.0
    %54 = vmatprep.subr.mxu0 0.0
    %55 = vmatpush1.msra.mxu0 0.0
    %56 = vmatprep.subr.mxu0 0.0
    %57 = vmatpush1.msra.mxu0 0.0
    %58 = vmatprep.subr.mxu0 0.0
    %59 = vmatpush1.msra.mxu0 0.0
    %60 = vmatprep.subr.mxu0 0.0
    %61 = vmatpush1.msra.mxu0 0.0
    %62 = vmatprep.subr.mxu0 0.0
    %63 = vmatpush1.msra.mxu0 0.0
    %64 = vmatprep.subr.mxu0 0.0
    %65 = vmatpush1.msra.mxu0 0.0
    %66 = vmatprep.subr.mxu0 0.0
    %67 = vmatpush1.msra.mxu0 0.0
    %68 = vmatprep.subr.mxu0 0.0
    %69 = vmatpush1.msra.mxu0 0.0
    %70 = vmatprep.subr.mxu0 0.0
    %71 = vmatpush1.msra.mxu0 0.0
    %72 = vmatprep.subr.mxu0 0.0
    %73 = vmatpush1.msra.mxu0 0.0
    %74 = vmatprep.subr.mxu0 0.0
    %75 = vmatpush1.msra.mxu0 %v50
    %76 = vmatprep.subr.mxu0 0.0
    %77 = vmatpush1.msra.mxu0 %v42
    %78 = vmatprep.subr.mxu0 0.0
    %79 = vmatpush1.msra.mxu0 %v41
    %80 = vmatprep.subr.mxu0 0.0
    %81 = vmatpush1.msra.mxu0 %v40
    %82 = vmatprep.subr.mxu0 0.0
    %83 = vmatpush1.msra.mxu0 %v39
    %84 = vmatprep.subr.mxu0 0.0
    %85 = vmatpush2.msra.mxu0 0.0
    %86 = vmatprep.subr.mxu0 0.0
    %87 = vmatpush2.msra.mxu0 0.0
    %88 = vmatprep.subr.mxu0 0.0
    %89 = vmatpush2.msra.mxu0 0.0
    %90 = vmatprep.subr.mxu0 0.0
    %91 = vmatpush2.msra.mxu0 0.0
    %92 = vmatprep.subr.mxu0 0.0
    %93 = vmatpush2.msra.mxu0 0.0
    %94 = vmatprep.subr.mxu0 0.0
    %95 = vmatpush2.msra.mxu0 0.0
    %96 = vmatprep.subr.mxu0 0.0
    %97 = vmatpush2.msra.mxu0 0.0
    %98 = vmatprep.subr.mxu0 0.0
    %99 = vmatpush2.msra.mxu0 0.0
    %100 = vmatprep.subr.mxu0 0.0
    %101 = vmatpush2.msra.mxu0 0.0
    %102 = vmatprep.subr.mxu0 0.0
    %103 = vmatpush2.msra.mxu0 0.0
    %104 = vmatprep.subr.mxu0 0.0
    %105 = vmatpush2.msra.mxu0 0.0
    %106 = vmatprep.subr.mxu0 0.0
    %107 = vmatpush2.msra.mxu0 0.0
    %108 = vmatprep.subr.mxu0 0.0
    %109 = vmatpush2.msra.mxu0 0.0
    %110 = vmatprep.subr.mxu0 0.0
    %111 = vmatpush2.msra.mxu0 0.0
    %112 = vmatprep.subr.mxu0 0.0
    %113 = vmatpush2.msra.mxu0 0.0
    %114 = vmatprep.subr.mxu0 0.0
    %115 = vmatpush2.msra.mxu0 0.0
    %116 = vmatprep.mubr.f32.mxu0 0.0
    %117 = vmatmul.mubr.f32.gmra.mxu0 %v46
    %v118 = vpop.f32.mrf.mxu0
    %v119 = vadd.f32 0.0, %v118
    %v120 = vpop.f32.mrf.mxu0
    %121 = vdwg.mxu0
    %122 = vst [vmem:[#allocation7] sm:$0xff] %v119
    // Predicated region
    $region18: #{tpu_custom_call.1} parent=1 // pred_check
      _
    $region19: #{tpu_custom_call.1} parent=1 // pred_check_branch
      %124 = sbr.rel (0) target = $region21
    $region20: #{tpu_custom_call.1} parent=1 // pred_region
      %s126 = ssub.s32 128, 128
      %127 = vsyncadd [#allocation4], %s126
      %s129 = sshll.u32 [#allocation7], 4
      %s130 = int_to_ptr.vmem [resolvable:$true] %s129
      %132 = dma.vmem_to_hbm [thread:$0]  %s130, 128, %s2, [#allocation4]
    $region21: #{tpu_custom_call.1} parent=1 // pred_fallthru
      _
    // Predicated region
    $region22: #{tpu_custom_call.1} parent=1 // pred_check
      _
    $region23: #{tpu_custom_call.1} parent=1 // pred_check_branch
      %134 = sbr.rel (0) target = $region25
    $region24: #{tpu_custom_call.1} parent=1 // pred_region
      %135 = dma.done [#allocation4], 128
    $region25: #{tpu_custom_call.1} parent=1 // pred_fallthru
      _
    %136 = vsyncpa [#allocation3], 1
    %137 = vsyncpa [#allocation6], 1
    %138 = vsyncpa [#allocation4], 1

</llo_original>
